<compile_context>
chip_gen: v5e
topology: v5e:2x2
jax: 0.10.0
libtpu: 0.0.40
codegen_flags: <defaults>
</compile_context>

<pallas_src>
import functools

import jax
import jax.numpy as jnp
from jax import lax
from jax.experimental import pallas as pl
from jax.experimental.pallas import tpu as pltpu


def _nt_logistic_kernel(row_ref, col_ref, out_ref, neg_acc_ref, *,
                        batch_size, tm, tn, inv_t, w_pos, w_neg):
    i = pl.program_id(0)            # row-tile index (parallel axis)
    j = pl.program_id(1)            # col-tile index (reduction axis, last)
    n_j = pl.num_programs(1)

    @pl.when(j == 0)
    def _init():
        out_ref[...] = jnp.zeros_like(out_ref)
        neg_acc_ref[...] = jnp.zeros_like(neg_acc_ref)

    # (tm, D) @ (tn, D)^T on the MXU: contract the feature (lane) axis of
    # both operands (no transpose materialization), f32 accumulation.
    dn = (((1,), (1,)), ((), ()))
    s = lax.dot_general(row_ref[...], col_ref[...], dn,
                        preferred_element_type=jnp.float32)
    z = s * inv_t

    # Stable log(sigmoid(-z)) — the dense "everything is a negative" value.
    # One exp + one log per S element; no overflow.
    lsn = -(jnp.maximum(z, 0.0) + jnp.log(1.0 + jnp.exp(-jnp.abs(z))))

    # Fast path: just accumulate (VALU add); weights & reduction deferred.
    neg_acc_ref[...] += lsn

    # Correction path: only tiles intersecting the main diagonal or the +-B
    # positive diagonals need masked work.  The tile covers index differences
    # d = c - r in the open interval (delta - tm, delta + tn).
    B = batch_size
    delta = j * tn - i * tm

    def _overlaps(off):
        return (delta - tm < off) & (delta + tn > off)

    needs_fix = _overlaps(0) | _overlaps(B) | _overlaps(-B)

    @pl.when(needs_fix)
    def _correct():
        d = (delta
             + lax.broadcasted_iota(jnp.int32, (tm, tn), 1)
             - lax.broadcasted_iota(jnp.int32, (tm, tn), 0))
        is_diag = d == 0
        is_pos = (d == B) | (d == -B)
        # Diagonal entries: dense path credited w_neg*lsn, should be 0
        #   -> correction = -w_neg * lsn
        # Positive entries: should be w_pos * log_sigmoid(z); dense path gave
        #   w_neg * lsn.  log_sigmoid(z) = z + log_sigmoid(-z) = z + lsn
        #   -> correction = w_pos * z + (w_pos - w_neg) * lsn
        corr = jnp.where(
            is_diag, (-w_neg) * lsn,
            jnp.where(is_pos, w_pos * z + (w_pos - w_neg) * lsn, 0.0))
        out_ref[...] += jnp.reshape(jnp.sum(corr, keepdims=True), (1, 1, 1))

    @pl.when(j == n_j - 1)
    def _finalize():
        total = w_neg * jnp.sum(neg_acc_ref[...], keepdims=True)   # one XLU reduce
        out_ref[...] += jnp.reshape(total, (1, 1, 1))


def _pick_tile(n, cap):
    """Largest multiple-of-8 divisor of n that is <= cap, else n (full)."""
    cap = min(n, cap)
    t = cap - cap % 8
    while t >= 8:
        if n % t == 0:
            return t
        t -= 8
    return n        # full-extent block is always a legal block dim


def _choose_tiles(M, D, itemsize):
    """Pick (tm, tn) against a conservative cross-generation VMEM budget."""
    cap = 512
    while True:
        tm = _pick_tile(M, cap)
        tn = _pick_tile(M, cap)
        # double-buffered row + col input blocks + f32 accumulator scratch
        vmem = 2 * 2 * (tm + tn) * D * itemsize + tm * tn * 4
        if vmem <= 24 * 1024 * 1024 or cap <= 64:
            break
        cap //= 2
    # Keep >= 2 row tiles so the "parallel" axis can shard across v7x's 2 TCs.
    if M // tm == 1 and M >= 16:
        tm2 = _pick_tile(M, max(8, M // 2))
        if tm2 < M:
            tm = tm2
    return tm, tn


def nt_logistic_loss(zis, zjs, *, temperature=0.5, use_cosine_similarity=True,
                     block_rows=None, block_cols=None,
                     mxu_dtype=jnp.bfloat16):
    """Pallas implementation of NTLogisticLoss.forward (method == 2)."""
    B, D = zis.shape
    assert zjs.shape == (B, D)
    M = 2 * B

    # One-time reps build + (optional) cosine row-normalization in plain XLA.
    reps = jnp.concatenate([zjs, zis], axis=0).astype(jnp.float32)
    if use_cosine_similarity:
        # TODO(synk): clamps per-row ||x|| at 1e-8 rather than torch's
        # max(||x||*||y||, 1e-8); only differs for near-zero embeddings.
        sq = jnp.sum(reps * reps, axis=-1, keepdims=True)
        reps = reps * lax.rsqrt(jnp.maximum(sq, 1e-16))
    if mxu_dtype is not None:
        reps = reps.astype(mxu_dtype)
    itemsize = jnp.dtype(reps.dtype).itemsize

    if block_rows is None or block_cols is None:
        auto_tm, auto_tn = _choose_tiles(M, D, itemsize)
        tm = block_rows if block_rows is not None else auto_tm
        tn = block_cols if block_cols is not None else auto_tn
    else:
        tm, tn = block_rows, block_cols
    assert M % tm == 0 and M % tn == 0, (M, tm, tn)
    assert (tm % 8 == 0 or tm == M) and (tn % 8 == 0 or tn == M), (tm, tn)
    n_i, n_j = M // tm, M // tn

    # method == 2 weighting with the final 1/(pos_count + neg_count)
    # normalization folded in: pos_count = M, neg_count = M*(M-2).
    w_pos = float(M - 2) / float(M - 1)
    w_neg = 1.0 / float(M - 1)

    kernel = functools.partial(
        _nt_logistic_kernel,
        batch_size=B, tm=tm, tn=tn,
        inv_t=1.0 / float(temperature),
        w_pos=w_pos, w_neg=w_neg)

    # Raise scoped VMEM only when the double-buffered footprint needs it
    # (v5e default is 16 MiB scoped; v7x physical is only 64 MiB).
    vmem_need = 2 * 2 * (tm + tn) * D * itemsize + tm * tn * 4 + (1 << 20)
    cp_kwargs = dict(dimension_semantics=("parallel", "arbitrary"))
    if vmem_need > 12 * 1024 * 1024:
        cp_kwargs["vmem_limit_bytes"] = min(2 * vmem_need, 64 * 1024 * 1024)

    partials = pl.pallas_call(
        kernel,
        out_shape=jax.ShapeDtypeStruct((n_i, 1, 1), jnp.float32),
        grid=(n_i, n_j),
        in_specs=[
            pl.BlockSpec((tm, D), lambda i, j: (i, 0)),   # row block of reps
            pl.BlockSpec((tn, D), lambda i, j: (j, 0)),   # col block of reps
        ],
        out_specs=pl.BlockSpec((1, 1, 1), lambda i, j: (i, 0, 0)),
        scratch_shapes=[pltpu.VMEM((tm, tn), jnp.float32)],
        compiler_params=pltpu.CompilerParams(**cp_kwargs),
    )(reps, reps)

    # Tiny final combine (n_i scalars); weights/normalization already folded.
    return -jnp.sum(partials)


def _reference_loss(zis, zjs, temperature, use_cosine_similarity, mxu_dtype):
    """Pure-JAX reference mirroring the PyTorch module (method == 2).

    Mirrors the kernel's hoisted per-row normalization and its (optional)
    bf16 matmul operands so the comparison isolates kernel correctness.
    """
    reps = jnp.concatenate([zjs, zis], axis=0).astype(jnp.float32)
    B = zis.shape[0]
    M = 2 * B
    if use_cosine_similarity:
        sq = jnp.sum(reps * reps, axis=-1, keepdims=True)
        reps = reps * lax.rsqrt(jnp.maximum(sq, 1e-16))
    if mxu_dtype is not None:
        reps = reps.astype(mxu_dtype)
    s = jnp.dot(reps, reps.T, preferred_element_type=jnp.float32)

    l_pos = jnp.diagonal(s, offset=B)
    r_pos = jnp.diagonal(s, offset=-B)
    positives = jnp.concatenate([l_pos, r_pos])
    i = jnp.arange(M)[:, None]
    j = jnp.arange(M)[None, :]
    neg_mask = ~((i == j) | (jnp.abs(i - j) == B))
    logits_pos = jnp.log(jax.nn.sigmoid(positives / temperature))
    logits_neg = jnp.where(
        neg_mask, jnp.log(jax.nn.sigmoid(-s / temperature)), 0.0)
    neg_count = M * (M - 2)
    pos_count = M
    loss = neg_count * jnp.sum(logits_pos) + pos_count * jnp.sum(logits_neg)
    return -loss / (pos_count + neg_count)


if __name__ == "__main__":
    key = jax.random.PRNGKey(0)
    batch_size, hidden = 16, 32
    k1, k2 = jax.random.split(key)
    zis = jax.random.normal(k1, (batch_size, hidden), dtype=jnp.float32)
    zjs = jax.random.normal(k2, (batch_size, hidden), dtype=jnp.float32)

    temperature = 0.5
    # 8x8 tiles over the (32, 32) similarity matrix -> a 4x4 grid, exercising
    # the pure-negative fast path, the pl.when correction tiles (i==j and
    # |i-j|==2) and the deferred per-row-tile reduction.
    for use_cosine in (True, False):
        for mxu_dtype in (jnp.float32, jnp.bfloat16):
            out = nt_logistic_loss(
                zis, zjs, temperature=temperature,
                use_cosine_similarity=use_cosine,
                block_rows=8, block_cols=8, mxu_dtype=mxu_dtype)
            out = jax.block_until_ready(out)
            ref = _reference_loss(zis, zjs, temperature, use_cosine, mxu_dtype)
            assert jnp.allclose(out, ref, rtol=1e-3, atol=1e-3), (
                use_cosine, mxu_dtype, out, ref)

    print("KERNEL_OK")
</pallas_src>

<mosaic_0001>
module attributes {stable_mosaic.version = 11 : i64} {
  func.func @_nt_logistic_kernel(%arg0: i32, %arg1: i32, %arg2: memref<8x32xf32, #tpu.memory_space<vmem>>, %arg3: memref<8x32xf32, #tpu.memory_space<vmem>>, %arg4: memref<1x1x1xf32, #tpu.memory_space<vmem>>, %arg5: memref<8x8xf32, #tpu.memory_space<vmem>>) attributes {dimension_semantics = [#tpu.dimension_semantics<parallel>, #tpu.dimension_semantics<arbitrary>], iteration_bounds = array<i64: 4, 4>, scalar_prefetch = 0 : i64, scratch_operands = 1 : i64, tpu.core_type = #tpu.core_type<tc>, window_params = [{transform_indices = @transform_0, window_bounds = array<i64: 8, 32>}, {transform_indices = @transform_1, window_bounds = array<i64: 8, 32>}, {transform_indices = @transform_2, window_bounds = array<i64: 1, 1, 1>}]} {
    %c0_i32 = arith.constant 0 : i32
    %0 = arith.cmpi eq, %arg1, %c0_i32 : i32
    %1 = arith.extui %0 : i1 to i32
    %c0_i32_0 = arith.constant 0 : i32
    %2 = arith.cmpi ne, %1, %c0_i32_0 : i32
    scf.if %2 {
      %cst_26 = arith.constant 0.000000e+00 : f32
      %48 = vector.broadcast %cst_26 : f32 to vector<1x1x1xf32>
      %c0_27 = arith.constant 0 : index
      %c0_28 = arith.constant 0 : index
      %c0_29 = arith.constant 0 : index
      %49 = vector.load %arg4[%c0_27, %c0_28, %c0_29] : memref<1x1x1xf32, #tpu.memory_space<vmem>>, vector<1x1x1xf32>
      tpu.vector_store %arg4[%c0_27, %c0_28, %c0_29], %48 {strides = array<i32>} : memref<1x1x1xf32, #tpu.memory_space<vmem>>, vector<1x1x1xf32>,
      %cst_30 = arith.constant 0.000000e+00 : f32
      %50 = vector.broadcast %cst_30 : f32 to vector<8x8xf32>
      %c0_31 = arith.constant 0 : index
      %c0_32 = arith.constant 0 : index
      %51 = vector.load %arg5[%c0_31, %c0_32] : memref<8x8xf32, #tpu.memory_space<vmem>>, vector<8x8xf32>
      tpu.vector_store %arg5[%c0_31, %c0_32], %50 {strides = array<i32>} : memref<8x8xf32, #tpu.memory_space<vmem>>, vector<8x8xf32>,
    } else {
    }
    %c0 = arith.constant 0 : index
    %c0_1 = arith.constant 0 : index
    %3 = vector.load %arg2[%c0, %c0_1] : memref<8x32xf32, #tpu.memory_space<vmem>>, vector<8x32xf32>
    %c0_2 = arith.constant 0 : index
    %c0_3 = arith.constant 0 : index
    %4 = vector.load %arg3[%c0_2, %c0_3] : memref<8x32xf32, #tpu.memory_space<vmem>>, vector<8x32xf32>
    %cst = arith.constant dense<0.000000e+00> : vector<8x8xf32>
    %5 = tpu.matmul %3, %4, %cst {dimension_numbers = #tpu.dot_dimension_numbers<[1], [1], [0], [0], [0, 0, 1, 0], [], []>} : vector<8x32xf32>, vector<8x32xf32>, vector<8x8xf32> -> vector<8x8xf32>
    %cst_4 = arith.constant 2.000000e+00 : f32
    %6 = vector.broadcast %cst_4 : f32 to vector<8x8xf32>
    %7 = arith.mulf %5, %6 : vector<8x8xf32>
    %cst_5 = arith.constant 0.000000e+00 : f32
    %8 = vector.broadcast %cst_5 : f32 to vector<8x8xf32>
    %9 = arith.maximumf %7, %8 : vector<8x8xf32>
    %10 = math.absf %7 : vector<8x8xf32>
    %cst_6 = arith.constant 0.000000e+00 : f32
    %11 = vector.broadcast %cst_6 : f32 to vector<8x8xf32>
    %12 = arith.subf %11, %10 : vector<8x8xf32>
    %13 = math.exp %12 : vector<8x8xf32>
    %cst_7 = arith.constant 1.000000e+00 : f32
    %14 = vector.broadcast %cst_7 : f32 to vector<8x8xf32>
    %15 = arith.addf %14, %13 : vector<8x8xf32>
    %16 = math.log %15 : vector<8x8xf32>
    %17 = arith.addf %9, %16 : vector<8x8xf32>
    %cst_8 = arith.constant 0.000000e+00 : f32
    %18 = vector.broadcast %cst_8 : f32 to vector<8x8xf32>
    %19 = arith.subf %18, %17 : vector<8x8xf32>
    %c0_9 = arith.constant 0 : index
    %c0_10 = arith.constant 0 : index
    %20 = vector.load %arg5[%c0_9, %c0_10] : memref<8x8xf32, #tpu.memory_space<vmem>>, vector<8x8xf32>
    %21 = arith.addf %20, %19 : vector<8x8xf32>
    %c0_11 = arith.constant 0 : index
    %c0_12 = arith.constant 0 : index
    %22 = vector.load %arg5[%c0_11, %c0_12] : memref<8x8xf32, #tpu.memory_space<vmem>>, vector<8x8xf32>
    tpu.vector_store %arg5[%c0_11, %c0_12], %21 {strides = array<i32>} : memref<8x8xf32, #tpu.memory_space<vmem>>, vector<8x8xf32>,
    %c8_i32 = arith.constant 8 : i32
    %23 = arith.muli %arg1, %c8_i32 : i32
    %c8_i32_13 = arith.constant 8 : i32
    %24 = arith.muli %arg0, %c8_i32_13 : i32
    %25 = arith.subi %23, %24 : i32
    %c8_i32_14 = arith.constant 8 : i32
    %26 = arith.subi %25, %c8_i32_14 : i32
    %c0_i32_15 = arith.constant 0 : i32
    %27 = arith.cmpi slt, %26, %c0_i32_15 : i32
    %c8_i32_16 = arith.constant 8 : i32
    %28 = arith.addi %25, %c8_i32_16 : i32
    %c0_i32_17 = arith.constant 0 : i32
    %29 = arith.cmpi sgt, %28, %c0_i32_17 : i32
    %30 = arith.andi %27, %29 : i1
    %c8_i32_18 = arith.constant 8 : i32
    %31 = arith.subi %25, %c8_i32_18 : i32
    %c16_i32 = arith.constant 16 : i32
    %32 = arith.cmpi slt, %31, %c16_i32 : i32
    %c8_i32_19 = arith.constant 8 : i32
    %33 = arith.addi %25, %c8_i32_19 : i32
    %c16_i32_20 = arith.constant 16 : i32
    %34 = arith.cmpi sgt, %33, %c16_i32_20 : i32
    %35 = arith.andi %32, %34 : i1
    %36 = arith.ori %30, %35 : i1
    %c8_i32_21 = arith.constant 8 : i32
    %37 = arith.subi %25, %c8_i32_21 : i32
    %c-16_i32 = arith.constant -16 : i32
    %38 = arith.cmpi slt, %37, %c-16_i32 : i32
    %c8_i32_22 = arith.constant 8 : i32
    %39 = arith.addi %25, %c8_i32_22 : i32
    %c-16_i32_23 = arith.constant -16 : i32
    %40 = arith.cmpi sgt, %39, %c-16_i32_23 : i32
    %41 = arith.andi %38, %40 : i1
    %42 = arith.ori %36, %41 : i1
    %43 = arith.extui %42 : i1 to i32
    %c0_i32_24 = arith.constant 0 : i32
    %44 = arith.cmpi ne, %43, %c0_i32_24 : i32
    scf.if %44 {
      %48 = tpu.iota {dimensions = array<i32: 1>} : vector<8x8xi32>
      %49 = vector.broadcast %25 : i32 to vector<8x8xi32>
      %50 = arith.addi %49, %48 : vector<8x8xi32>
      %51 = tpu.iota {dimensions = array<i32: 0>} : vector<8x8xi32>
      %52 = arith.subi %50, %51 : vector<8x8xi32>
      %c0_i32_26 = arith.constant 0 : i32
      %53 = vector.broadcast %c0_i32_26 : i32 to vector<8x8xi32>
      %54 = arith.cmpi eq, %52, %53 : vector<8x8xi32>
      %c16_i32_27 = arith.constant 16 : i32
      %55 = vector.broadcast %c16_i32_27 : i32 to vector<8x8xi32>
      %56 = arith.cmpi eq, %52, %55 : vector<8x8xi32>
      %c-16_i32_28 = arith.constant -16 : i32
      %57 = vector.broadcast %c-16_i32_28 : i32 to vector<8x8xi32>
      %58 = arith.cmpi eq, %52, %57 : vector<8x8xi32>
      %59 = arith.ori %56, %58 : vector<8x8xi1>
      %cst_29 = arith.constant -0.0322580636 : f32
      %60 = vector.broadcast %cst_29 : f32 to vector<8x8xf32>
      %61 = arith.mulf %60, %19 : vector<8x8xf32>
      %cst_30 = arith.constant 0.967741906 : f32
      %62 = vector.broadcast %cst_30 : f32 to vector<8x8xf32>
      %63 = arith.mulf %62, %7 : vector<8x8xf32>
      %cst_31 = arith.constant 0.935483872 : f32
      %64 = vector.broadcast %cst_31 : f32 to vector<8x8xf32>
      %65 = arith.mulf %64, %19 : vector<8x8xf32>
      %66 = arith.addf %63, %65 : vector<8x8xf32>
      %cst_32 = arith.constant 0.000000e+00 : f32
      %67 = vector.broadcast %cst_32 : f32 to vector<8x8xf32>
      %68 = arith.select %59, %66, %67 : vector<8x8xi1>, vector<8x8xf32>
      %69 = arith.select %54, %61, %68 : vector<8x8xi1>, vector<8x8xf32>
      %c0_33 = arith.constant 0 : index
      %c0_34 = arith.constant 0 : index
      %c0_35 = arith.constant 0 : index
      %70 = vector.load %arg4[%c0_33, %c0_34, %c0_35] : memref<1x1x1xf32, #tpu.memory_space<vmem>>, vector<1x1x1xf32>
      %71 = vector.shape_cast %69 : vector<8x8xf32> to vector<1x8x8xf32>
      %cst_36 = arith.constant dense<0.000000e+00> : vector<1xf32>
      %72 = vector.multi_reduction <add>, %71, %cst_36 [1, 2] : vector<1x8x8xf32> to vector<1xf32>
      %73 = vector.shape_cast %72 : vector<1xf32> to vector<1x1x1xf32>
      %74 = vector.extract %73[0, 0, 0] : f32 from vector<1x1x1xf32>
      %75 = vector.broadcast %74 : f32 to vector<1x1xf32>
      %76 = vector.shape_cast %75 : vector<1x1xf32> to vector<1x1x1xf32>
      %77 = arith.addf %70, %76 : vector<1x1x1xf32>
      %c0_37 = arith.constant 0 : index
      %c0_38 = arith.constant 0 : index
      %c0_39 = arith.constant 0 : index
      %78 = vector.load %arg4[%c0_37, %c0_38, %c0_39] : memref<1x1x1xf32, #tpu.memory_space<vmem>>, vector<1x1x1xf32>
      tpu.vector_store %arg4[%c0_37, %c0_38, %c0_39], %77 {strides = array<i32>} : memref<1x1x1xf32, #tpu.memory_space<vmem>>, vector<1x1x1xf32>,
    } else {
    }
    %c3_i32 = arith.constant 3 : i32
    %45 = arith.cmpi eq, %arg1, %c3_i32 : i32
    %46 = arith.extui %45 : i1 to i32
    %c0_i32_25 = arith.constant 0 : i32
    %47 = arith.cmpi ne, %46, %c0_i32_25 : i32
    scf.if %47 {
      %c0_26 = arith.constant 0 : index
      %c0_27 = arith.constant 0 : index
      %48 = vector.load %arg5[%c0_26, %c0_27] : memref<8x8xf32, #tpu.memory_space<vmem>>, vector<8x8xf32>
      %49 = vector.shape_cast %48 : vector<8x8xf32> to vector<1x8x8xf32>
      %cst_28 = arith.constant dense<0.000000e+00> : vector<1xf32>
      %50 = vector.multi_reduction <add>, %49, %cst_28 [1, 2] : vector<1x8x8xf32> to vector<1xf32>
      %51 = vector.shape_cast %50 : vector<1xf32> to vector<1x1x1xf32>
      %52 = vector.extract %51[0, 0, 0] : f32 from vector<1x1x1xf32>
      %53 = vector.broadcast %52 : f32 to vector<1x1xf32>
      %cst_29 = arith.constant 0.0322580636 : f32
      %54 = vector.broadcast %cst_29 : f32 to vector<1x1xf32>
      %55 = arith.mulf %54, %53 : vector<1x1xf32>
      %c0_30 = arith.constant 0 : index
      %c0_31 = arith.constant 0 : index
      %c0_32 = arith.constant 0 : index
      %56 = vector.load %arg4[%c0_30, %c0_31, %c0_32] : memref<1x1x1xf32, #tpu.memory_space<vmem>>, vector<1x1x1xf32>
      %57 = vector.shape_cast %55 : vector<1x1xf32> to vector<1x1x1xf32>
      %58 = arith.addf %56, %57 : vector<1x1x1xf32>
      %c0_33 = arith.constant 0 : index
      %c0_34 = arith.constant 0 : index
      %c0_35 = arith.constant 0 : index
      %59 = vector.load %arg4[%c0_33, %c0_34, %c0_35] : memref<1x1x1xf32, #tpu.memory_space<vmem>>, vector<1x1x1xf32>
      tpu.vector_store %arg4[%c0_33, %c0_34, %c0_35], %58 {strides = array<i32>} : memref<1x1x1xf32, #tpu.memory_space<vmem>>, vector<1x1x1xf32>,
    } else {
    }
    return
  }
  func.func @transform_0(%arg0: i32, %arg1: i32) -> (i32, i32) {
    %c0_i32 = arith.constant 0 : i32
    %c0_i32_0 = arith.constant 0 : i32
    return %arg0, %c0_i32 : i32, i32
  }
  func.func @transform_1(%arg0: i32, %arg1: i32) -> (i32, i32) {
    %c0_i32 = arith.constant 0 : i32
    %c0_i32_0 = arith.constant 0 : i32
    return %arg1, %c0_i32 : i32, i32
  }
  func.func @transform_2(%arg0: i32, %arg1: i32) -> (i32, i32, i32) {
    %c0_i32 = arith.constant 0 : i32
    %c0_i32_0 = arith.constant 0 : i32
    %c0_i32_1 = arith.constant 0 : i32
    return %arg0, %c0_i32, %c0_i32_0 : i32, i32, i32
  }
}

</mosaic_0001>

<llo_original>
// kernel: tpu_custom_call.1
$region0: #{tpu_custom_call.1}
  #allocation0 [shape = 'u32[]', space=smem, size = 0x4, offset = 0x4, fixed_abs, tag = 'smem constant byte address 0x4 - core index']
  #allocation1 [shape = 'u32[72,128]{1,0:T(1,128)}', space=vmem, size = 0x9000, scoped, tag = 'internal scratch']
  #allocation2 [shape = 'f32[8,8]{1,0:T(8,128)}', space=vmem, size = 0x1000, scoped, tag = 'scratch operand']
  %s0 = inlined_call_operand.hbm [shape: f32[32,32], index: 0, kind: input, shape index: {}]
  %s1 = inlined_call_operand.hbm [shape: f32[32,32], index: 1, kind: input, shape index: {}]
  %s2 = inlined_call_operand.vmem [shape: f32[4,1,1], index: 2, kind: output, shape index: {}]
  %s3 = sld [smem:[#allocation0]]
  $region61: #{tpu_custom_call.1} parent=0
    _
  %s5 = ssub.s32 1, %s3
  %s6 = scalar_select 0, %s5, %s3
  $region1: #{tpu_custom_call.1} parent=0
    #allocation3 [shape = 'u8[8192]{0}', space=vmem, size = 0x2000, scoped, tag = 'input window, operand 0']
    #allocation4 [shape = 's32[2]{0}', space=sflag, size = 0x8, scoped, tag = 'scoped memory for tpu_custom_call.1']
    #allocation5 [shape = 'u8[8192]{0}', space=vmem, size = 0x2000, scoped, tag = 'input window, operand 1']
    #allocation6 [shape = 's32[2]{0}', space=sflag, size = 0x8, scoped, tag = 'scoped memory for tpu_custom_call.1']
    %7 = vsyncpa [#allocation4], 0
    %s8 = scalar_lea.sflag [#allocation4], 1
    %9 = vsyncpa %s8, 0
    %10 = vsyncpa [#allocation6], 0
    %s11 = scalar_lea.sflag [#allocation6], 1
    %12 = vsyncpa %s11, 0
    loop: start=0, step=1, limit=18
    $region2: #{tpu_custom_call.1} parent=1 // loop_pre_header
      _
    $region3: #{tpu_custom_call.1} parent=1 // loop_header
      %s14 = sphi 0, %s18
      %p15 = scmp.ge.s32.totalorder %s14, 18
      %s21 = sphi 0, %s33
      %s22 = sphi 0, %s29
      %s23 = sphi 0, %s21
      %s24 = sphi 0, %s22
      %s25 = sphi 0, %s23
      %s26 = sphi 0, %s24
      %s36 = sphi 0, %s38
      %s39 = sphi 0, %s36
      %s40 = sphi 0, %s39
      %s56 = sphi 0, %s40
      %s62 = sphi 0, %s64
      %s65 = sphi 0, %s62
      %s66 = sphi 0, %s65
      %s82 = sphi 0, %s66
      %s88 = sphi 0, %s90
      %s91 = sphi 0, %s88
      %s92 = sphi 0, %s91
      %s108 = sphi 0, %s92
    $region4: #{tpu_custom_call.1} parent=1 // loop_header_branch
      %17 = sbr.rel (%p15) target = $region8
    $region5: #{tpu_custom_call.1} parent=1 // loop_body
      %s19 = ssub.s32 %s14, 1
      %s20 = ssub.s32 %s14, 2
      %s27 = sadd.s32 1, %s22
      %p28 = scmp.ge.s32.totalorder %s27, 4
      %s29 = scalar_select %p28, 0, %s27
      %s30 = sadd.s32 1, %s21
      %s31 = scalar_select %p28, %s30, %s21
      %p32 = scmp.ge.s32.totalorder %s31, 4
      %s33 = scalar_select %p32, 0, %s31
      %s34 = ssub.s32 %s21, %s33
      %p35 = scmp.eq.s32.totalorder %s34, 0
      %s37 = sadd.s32 %s36, 1
      %s38 = scalar_select %p35, %s36, %s37
      %p41 = pneg %p35
      %p42 = scmp.eq.s32.totalorder %s14, 15
      %p43 = por %p41, %p42
      %p44 = scmp.ne.s32.totalorder %s36, %s39
      %p45 = scmp.eq.s32.totalorder %s14, 0
      %p46 = por %p44, %p45
      %p47 = scmp.ne.s32.totalorder %s36, %s39
      %p48 = scmp.eq.s32.totalorder %s19, 15
      %p49 = por %p47, %p48
      %p50 = scmp.ne.s32.totalorder %s39, %s40
      %p51 = scmp.eq.s32.totalorder %s19, 0
      %p52 = por %p50, %p51
      %p53 = scmp.ne.s32.totalorder %s39, %s40
      %p54 = scmp.eq.s32.totalorder %s20, 15
      %p55 = por %p53, %p54
      %p57 = scmp.ne.s32.totalorder %s40, %s56
      %p58 = scmp.eq.s32.totalorder %s20, 0
      %p59 = por %p57, %p58
      %s60 = ssub.s32 %s22, %s29
      %p61 = scmp.eq.s32.totalorder %s60, 0
      %s63 = sadd.s32 %s62, 1
      %s64 = scalar_select %p61, %s62, %s63
      %p67 = pneg %p61
      %p68 = scmp.eq.s32.totalorder %s14, 15
      %p69 = por %p67, %p68
      %p70 = scmp.ne.s32.totalorder %s62, %s65
      %p71 = scmp.eq.s32.totalorder %s14, 0
      %p72 = por %p70, %p71
      %p73 = scmp.ne.s32.totalorder %s62, %s65
      %p74 = scmp.eq.s32.totalorder %s19, 15
      %p75 = por %p73, %p74
      %p76 = scmp.ne.s32.totalorder %s65, %s66
      %p77 = scmp.eq.s32.totalorder %s19, 0
      %p78 = por %p76, %p77
      %p79 = scmp.ne.s32.totalorder %s65, %s66
      %p80 = scmp.eq.s32.totalorder %s20, 15
      %p81 = por %p79, %p80
      %p83 = scmp.ne.s32.totalorder %s66, %s82
      %p84 = scmp.eq.s32.totalorder %s20, 0
      %p85 = por %p83, %p84
      %s86 = ssub.s32 %s21, %s33
      %p87 = scmp.eq.s32.totalorder %s86, 0
      %s89 = sadd.s32 %s88, 1
      %s90 = scalar_select %p87, %s88, %s89
      %p93 = pneg %p87
      %p94 = scmp.eq.s32.totalorder %s14, 15
      %p95 = por %p93, %p94
      %p96 = scmp.ne.s32.totalorder %s88, %s91
      %p97 = scmp.eq.s32.totalorder %s14, 0
      %p98 = por %p96, %p97
      %p99 = scmp.ne.s32.totalorder %s88, %s91
      %p100 = scmp.eq.s32.totalorder %s19, 15
      %p101 = por %p99, %p100
      %p102 = scmp.ne.s32.totalorder %s91, %s92
      %p103 = scmp.eq.s32.totalorder %s19, 0
      %p104 = por %p102, %p103
      %p105 = scmp.ne.s32.totalorder %s91, %s92
      %p106 = scmp.eq.s32.totalorder %s20, 15
      %p107 = por %p105, %p106
      %p109 = scmp.ne.s32.totalorder %s92, %s108
      %p110 = scmp.eq.s32.totalorder %s20, 0
      %p111 = por %p109, %p110
      %p112 = scmp.le.s32.totalorder 1, %s14
      %p113 = scmp.lt.s32.totalorder %s14, 17
      %p114 = pnand %p112, %p113
      %p115 = pneg %p114
      // Predicated region
      $region9: #{tpu_custom_call.1} parent=5 // pred_check
        _
      $region10: #{tpu_custom_call.1} parent=5 // pred_check_branch
        %117 = sbr.rel (%p114) target = $region12
      $region11: #{tpu_custom_call.1} parent=5 // pred_region
        %s118 = ssub.s32 %s14, 1
      $region12: #{tpu_custom_call.1} parent=5 // pred_fallthru
        _
      %p119 = scmp.lt.s32.totalorder %s14, 16
      // Predicated region
      $region13: #{tpu_custom_call.1} parent=5 // pred_check
        %p120 = pneg %p119
      $region14: #{tpu_custom_call.1} parent=5 // pred_check_branch
        %122 = sbr.rel (%p120) target = $region16
      $region15: #{tpu_custom_call.1} parent=5 // pred_region
        // Predicated region
        $region17: #{tpu_custom_call.1} parent=15 // pred_check
          %p123 = pneg %p46
        $region18: #{tpu_custom_call.1} parent=15 // pred_check_branch
          %125 = sbr.rel (%p123) target = $region20
        $region19: #{tpu_custom_call.1} parent=15 // pred_region
          %s126 = sand.u32 %s36, 1
          %s127 = scalar_lea.sflag [#allocation4], %s126
          %s128 = sand.u32 %s36, 1
          %s129 = smul.addr %s128, 8
          %s130 = scalar_lea.vmem [#allocation3], %s129
          %132 = vsyncadd %s127, 0
          %s133 = smul.addr %s21, 8
          %s134 = scalar_lea.hbm %s0, %s133
          %s136 = sshll.u32 %s134, 4
          %s137 = int_to_ptr.hbm [resolvable:$true] %s136
          %s138 = sshll.u32 %s130, 4
          %s139 = int_to_ptr.vmem [resolvable:$true] %s138
          %141 = dma.hbm_to_vmem [thread:$0]  %s137, 128, %s139, %s127
        $region20: #{tpu_custom_call.1} parent=15 // pred_fallthru
          _
        // Predicated region
        $region21: #{tpu_custom_call.1} parent=15 // pred_check
          %p142 = pneg %p72
        $region22: #{tpu_custom_call.1} parent=15 // pred_check_branch
          %144 = sbr.rel (%p142) target = $region24
        $region23: #{tpu_custom_call.1} parent=15 // pred_region
          %s145 = sand.u32 %s62, 1
          %s146 = scalar_lea.sflag [#allocation6], %s145
          %s147 = sand.u32 %s62, 1
          %s148 = smul.addr %s147, 8
          %s149 = scalar_lea.vmem [#allocation5], %s148
          %151 = vsyncadd %s146, 0
          %s152 = smul.addr %s22, 8
          %s153 = scalar_lea.hbm %s1, %s152
          %s155 = sshll.u32 %s153, 4
          %s156 = int_to_ptr.hbm [resolvable:$true] %s155
          %s157 = sshll.u32 %s149, 4
          %s158 = int_to_ptr.vmem [resolvable:$true] %s157
          %160 = dma.hbm_to_vmem [thread:$0]  %s156, 128, %s158, %s146
        $region24: #{tpu_custom_call.1} parent=15 // pred_fallthru
          _
      $region16: #{tpu_custom_call.1} parent=5 // pred_fallthru
        _
      %p161 = scmp.le.s32.totalorder 1, %s14
      %p162 = scmp.lt.s32.totalorder %s14, 17
      %p163 = pnand %p161, %p162
      %p164 = pneg %p163
      // Predicated region
      $region25: #{tpu_custom_call.1} parent=5 // pred_check
        _
      $region26: #{tpu_custom_call.1} parent=5 // pred_check_branch
        %166 = sbr.rel (%p163) target = $region28
      $region27: #{tpu_custom_call.1} parent=5 // pred_region
        %s167 = ssub.s32 %s14, 1
        %s168 = sand.u32 %s39, 1
        %s169 = scalar_lea.sflag [#allocation4], %s168
        %s170 = sand.u32 %s39, 1
        %s171 = smul.addr %s170, 8
        %s172 = scalar_lea.vmem [#allocation3], %s171
        // Predicated region
        $region29: #{tpu_custom_call.1} parent=27 // pred_check
          %p173 = pneg %p52
        $region30: #{tpu_custom_call.1} parent=27 // pred_check_branch
          %175 = sbr.rel (%p173) target = $region32
        $region31: #{tpu_custom_call.1} parent=27 // pred_region
          %177 = dma.done %s169, 128
        $region32: #{tpu_custom_call.1} parent=27 // pred_fallthru
          _
        %s178 = sand.u32 %s65, 1
        %s179 = scalar_lea.sflag [#allocation6], %s178
        %s180 = sand.u32 %s65, 1
        %s181 = smul.addr %s180, 8
        %s182 = scalar_lea.vmem [#allocation5], %s181
        // Predicated region
        $region33: #{tpu_custom_call.1} parent=27 // pred_check
          %p183 = pneg %p78
        $region34: #{tpu_custom_call.1} parent=27 // pred_check_branch
          %185 = sbr.rel (%p183) target = $region36
        $region35: #{tpu_custom_call.1} parent=27 // pred_region
          %187 = dma.done %s179, 128
        $region36: #{tpu_custom_call.1} parent=27 // pred_fallthru
          _
        %s188 = sand.u32 %s39, 1
        %s189 = scalar_lea.sflag [#allocation4], %s188
        %s190 = sand.u32 %s39, 1
        %s191 = smul.addr %s190, 8
        %s192 = scalar_lea.vmem [#allocation3], %s191
        %p193 = pneg %p52
        %p194 = pneg %p49
        %s195 = sand.u32 %s65, 1
        %s196 = scalar_lea.sflag [#allocation6], %s195
        %s197 = sand.u32 %s65, 1
        %s198 = smul.addr %s197, 8
        %s199 = scalar_lea.vmem [#allocation5], %s198
        %p200 = pneg %p78
        %p201 = pneg %p75
        %p202 = pneg %p104
        %p203 = pneg %p101
        %p204 = scmp.lt.s32.totalorder %s23, 3
        %s205 = scalar_select %p204, %s23, 3
        %s206 = scalar_lea.vmem %s2, %s205
        %p207 = scmp.lt.s32.totalorder %s23, 3
        %s208 = scalar_select %p207, %s23, 3
        %s209 = scalar_lea.vmem %s2, %s208
        %p210 = scmp.eq.s32.totalorder %s24, 0
        // Predicated region
        $region37: #{tpu_custom_call.1} parent=27 // pred_check
          %p211 = pneg %p210
        $region38: #{tpu_custom_call.1} parent=27 // pred_check_branch
          %213 = sbr.rel (%p211) target = $region40
        $region39: #{tpu_custom_call.1} parent=27 // pred_region
          %vm214 = vcmask 0
          %215 = vst.msk [vmem:[%s209] sm:$0x1] %vm214, 0.0
          %vm216 = vcmask 64512
          %217 = vst.msk [vmem:[#allocation2] sm:$0xff] %vm216, 0.0
        $region40: #{tpu_custom_call.1} parent=27 // pred_fallthru
          _
        %v218 = vld [vmem:[%s172] sm:$0xff]
        %v219 = vld [vmem:[%s182] sm:$0xff]
        %vm220 = vcmask 261120
        %v222 = vsel %vm220, %v218, 0
        %v225 = vsel %vm220, %v219, 0
        %227 = vmatpush.xpose.msra.mxu0 0.0
        %228 = vmatpush.xpose.msra.mxu0 0.0
        %229 = vmatpush.xpose.msra.mxu0 0.0
        %230 = vmatpush.xpose.msra.mxu0 0.0
        %231 = vmatpush.xpose.msra.mxu0 0.0
        %232 = vmatpush.xpose.msra.mxu0 0.0
        %233 = vmatpush.xpose.msra.mxu0 0.0
        %234 = vmatpush.xpose.msra.mxu0 0.0
        %235 = vmatpush.xpose.msra.mxu0 0.0
        %236 = vmatpush.xpose.msra.mxu0 0.0
        %237 = vmatpush.xpose.msra.mxu0 0.0
        %238 = vmatpush.xpose.msra.mxu0 0.0
        %239 = vmatpush.xpose.msra.mxu0 0.0
        %240 = vmatpush.xpose.msra.mxu0 0.0
        %241 = vmatpush.xpose.msra.mxu0 0.0
        %242 = vmatpush.xpose.msra.mxu0 %v225
        %243 = vmatmul.f32.gmra.mxu0 %v222
        %v244 = vpop.f32.mrf.mxu0
        %v245 = vadd.f32 0.0, %v244
        %246 = vdwg.mxu0
        %v247 = vmul.f32 %v245, 2.0
        %v248 = vmax.f32 %v247, 0.0
        %v249 = vand.u32 2147483647, %v247
        %v250 = vsub.f32 0.0, %v249
        %v251 = vmul.f32 %v250, 1.442695
        %v252 = vpow.pop %v251
        %v253 = vadd.f32 %v252, 1.0
        %v254 = vlog2.pop %v253
        %v255 = vmul.f32 %v254, 0.6931472
        %v256 = vadd.f32 %v248, %v255
        %v257 = vsub.f32 0.0, %v256
        %v258 = vld [vmem:[#allocation2] sm:$0xff]
        %v259 = vadd.f32 %v258, %v257
        %vm260 = vcmask 64512
        %261 = vst.msk [vmem:[#allocation2] sm:$0xff] %vm260, %v259
        %s262 = smul.u32 %s24, 8
        %s263 = smul.u32 %s23, 8
        %s264 = ssub.s32 %s262, %s263
        %s265 = ssub.s32 %s264, 8
        %p266 = scmp.lt.s32.totalorder %s265, 0
        %s267 = sadd.s32 %s264, 8
        %p268 = scmp.gt.s32.totalorder %s267, 0
        %p269 = pnand %p266, %p268
        %p270 = pneg %p269
        %p271 = scmp.lt.s32.totalorder %s265, 16
        %p272 = scmp.gt.s32.totalorder %s267, 16
        %p273 = pnand %p271, %p272
        %p274 = pneg %p273
        %p275 = por %p270, %p274
        %p276 = scmp.lt.s32.totalorder %s265, 4294967280
        %p277 = scmp.gt.s32.totalorder %s267, 4294967280
        %p278 = pnand %p276, %p277
        %p279 = pneg %p278
        %p280 = por %p275, %p279
        // Predicated region
        $region41: #{tpu_custom_call.1} parent=27 // pred_check
          %p281 = pneg %p280
        $region42: #{tpu_custom_call.1} parent=27 // pred_check_branch
          %283 = sbr.rel (%p281) target = $region44
        $region43: #{tpu_custom_call.1} parent=27 // pred_region
          %v284 = vlaneseq
          %v285 = vand.u32 %v284, 127
          %v286 = vstv %s264
          %v287 = vadd.s32 %v286, %v285
          %v288 = vlaneseq
          %v289 = vshrl.u32 %v288, 7
          %v290 = vsub.s32 %v287, %v289
          %vm291 = vcmp.eq.s32.totalorder %v290, 0
          %vm292 = vcmp.eq.s32.totalorder %v290, 16
          %vm293 = vcmp.eq.s32.totalorder %v290, 4294967280
          %vm294 = vmor %vm292, %vm293
          %v295 = vmul.f32 %v257, -0.032258064
          %v296 = vmul.f32 %v247, 0.9677419
          %v297 = vmul.f32 %v257, 0.9354839
          %v298 = vadd.f32 %v296, %v297
          %v299 = vsel %vm294, %v298, 0.0
          %v300 = vsel %vm291, %v295, %v299
          %v301 = vld [vmem:[%s209] sm:$0x1]
          %v302 = vsel %vm260, %v300, 0.0
          %303 = vadd.xlane.f32.xlu0 %v302
          %v304 = vpop.xlane.xlu0 %303
          %v305 = vrot.slane %v304, 4
          %v306 = vadd.f32 %v304, %v305
          %v307 = vrot.slane %v306, 2
          %v308 = vadd.f32 %v306, %v307
          %v309 = vrot.slane %v308, 1
          %v310 = vadd.f32 %v308, %v309
          %s311 = vtos %v310
          %v312 = vstv %s311
          %v313 = vadd.f32 %v301, %v312
          %vm314 = vcmask 0
          %315 = vst.msk [vmem:[%s209] sm:$0x1] %vm314, %v313
        $region44: #{tpu_custom_call.1} parent=27 // pred_fallthru
          _
        %p316 = scmp.eq.s32.totalorder %s24, 3
        // Predicated region
        $region45: #{tpu_custom_call.1} parent=27 // pred_check
          %p317 = pneg %p316
        $region46: #{tpu_custom_call.1} parent=27 // pred_check_branch
          %319 = sbr.rel (%p317) target = $region48
        $region47: #{tpu_custom_call.1} parent=27 // pred_region
          %v320 = vld [vmem:[#allocation2] sm:$0xff]
          %v321 = vsel %vm260, %v320, 0.0
          %322 = vadd.xlane.f32.xlu0 %v321
          %v323 = vpop.xlane.xlu0 %322
          %v324 = vrot.slane %v323, 4
          %v325 = vadd.f32 %v323, %v324
          %v326 = vrot.slane %v325, 2
          %v327 = vadd.f32 %v325, %v326
          %v328 = vrot.slane %v327, 1
          %v329 = vadd.f32 %v327, %v328
          %s330 = vtos %v329
          %v331 = vstv %s330
          %v332 = vmul.f32 %v331, 0.032258064
          %v333 = vld [vmem:[%s209] sm:$0x1]
          %v334 = vadd.f32 %v333, %v332
          %vm335 = vcmask 0
          %336 = vst.msk [vmem:[%s209] sm:$0x1] %vm335, %v334
        $region48: #{tpu_custom_call.1} parent=27 // pred_fallthru
          _
        %p337 = scmp.lt.s32.totalorder %s23, 3
        %s338 = scalar_select %p337, %s23, 3
        %s339 = scalar_lea.vmem %s2, %s338
        // Predicated region
        $region49: #{tpu_custom_call.1} parent=27 // pred_check
          %p340 = pneg %p101
        $region50: #{tpu_custom_call.1} parent=27 // pred_check_branch
          %342 = sbr.rel (%p340) target = $region52
        $region51: #{tpu_custom_call.1} parent=27 // pred_region
          _
        $region52: #{tpu_custom_call.1} parent=27 // pred_fallthru
          _
      $region28: #{tpu_custom_call.1} parent=5 // pred_fallthru
        _
      %p343 = scmp.le.s32.totalorder 2, %s14
      // Predicated region
      $region53: #{tpu_custom_call.1} parent=5 // pred_check
        %p344 = pneg %p343
      $region54: #{tpu_custom_call.1} parent=5 // pred_check_branch
        %346 = sbr.rel (%p344) target = $region56
      $region55: #{tpu_custom_call.1} parent=5 // pred_region
        %s347 = ssub.s32 %s14, 2
        // Predicated region
        $region57: #{tpu_custom_call.1} parent=55 // pred_check
          %p348 = pneg %p107
        $region58: #{tpu_custom_call.1} parent=55 // pred_check_branch
          %350 = sbr.rel (%p348) target = $region60
        $region59: #{tpu_custom_call.1} parent=55 // pred_region
          %p351 = scmp.lt.s32.totalorder %s25, 3
          %s352 = scalar_select %p351, %s25, 3
          %s353 = scalar_lea.vmem %s2, %s352
        $region60: #{tpu_custom_call.1} parent=55 // pred_fallthru
          _
      $region56: #{tpu_custom_call.1} parent=5 // pred_fallthru
        _
    $region6: #{tpu_custom_call.1} parent=1 // loop_footer
      %s18 = sadd.s32 1, %s14
    $region7: #{tpu_custom_call.1} parent=1 // loop_footer_branch
      %13 = sbr.rel target = $region3
    $region8: #{tpu_custom_call.1} parent=1 // loop_exit
      _
    %354 = vsyncpa [#allocation4], 1
    %s355 = scalar_lea.sflag [#allocation4], 1
    %356 = vsyncpa %s355, 1
    %357 = vsyncpa [#allocation6], 1
    %s358 = scalar_lea.sflag [#allocation6], 1
    %359 = vsyncpa %s358, 1

</llo_original>
